<compile_context>
chip_gen: v7x
topology: tpu7x:2x2x1
jax: 0.10.0
libtpu: 0.0.40
codegen_flags: <defaults>
</compile_context>

<pallas_src>
import functools

import jax
import jax.numpy as jnp
from jax import lax
from jax.experimental import pallas as pl
from jax.experimental.pallas import tpu as pltpu

HIDDEN = 64          # per-network hidden width (fixed by the PyTorch module)
FUSED = 2 * HIDDEN   # 128 = fused (actor | critic) lane-dense width


def _fused_actor_critic_kernel(x_ref, w1_ref, w2_ref, w3_ref, b_ref, out_ref, *, action_dim):
    A = action_dim
    x = x_ref[...]                                                   # (TB, S) bf16

    # Three lane-dense bf16 MXU matmuls with f32 accumulation; tanh in bf16 rides the EUP
    # at double throughput on v6e/v7x and feeds the next bf16 matmul directly.
    z1 = jnp.dot(x, w1_ref[...], preferred_element_type=jnp.float32) + b_ref[0:1, :]
    h1 = jnp.tanh(z1.astype(jnp.bfloat16))                           # (TB, 128) bf16
    z2 = jnp.dot(h1, w2_ref[...], preferred_element_type=jnp.float32) + b_ref[1:2, :]
    h2 = jnp.tanh(z2.astype(jnp.bfloat16))                           # (TB, 128) bf16
    out3 = jnp.dot(h2, w3_ref[...], preferred_element_type=jnp.float32) + b_ref[2:3, :]
    # out3 lanes: [0,A) actor logits, lane A critic value, remaining lanes exactly 0.

    lane = lax.broadcasted_iota(jnp.int32, out3.shape, 1)
    valid = lane < A

    logits_m = jnp.where(valid, out3, -jnp.inf)
    m = jnp.max(logits_m, axis=-1, keepdims=True)
    # bf16 exp through the EUP; -inf lanes stay exactly 0 after exp.
    e = jnp.exp((logits_m - m).astype(jnp.bfloat16)).astype(jnp.float32)
    denom = jnp.sum(e, axis=-1, keepdims=True)
    probs = e * pl.reciprocal(denom, approx=True)                    # single EUP vrcp per row
    logse = m + jnp.log(denom)
    logp = jnp.where(valid, out3 - logse, 0.0)                       # stable log-softmax
    entropy = -jnp.sum(probs * logp, axis=-1, keepdims=True)         # (TB, 1)
    value = jnp.sum(jnp.where(lane == A, out3, 0.0), axis=-1, keepdims=True)  # (TB, 1)

    # Assemble one lane-dense 128-wide output slab (stored in bf16 to halve writeback).
    slab = probs                                                     # lanes [0, A)
    slab = slab + jnp.where((lane >= A) & (lane < 2 * A),
                            pltpu.roll(logp, A, axis=1), 0.0)        # lanes [A, 2A)
    slab = slab + jnp.where(lane == 2 * A, value, 0.0)               # lane 2A
    slab = slab + jnp.where(lane == 2 * A + 1, entropy, 0.0)         # lane 2A+1
    out_ref[...] = slab.astype(out_ref.dtype)


def _round_up(n, m):
    return ((n + m - 1) // m) * m


def _choose_tile(B, block_b):
    """Batch tile: 16-sublane aligned (bf16 packing), even grid count >= 2 so the
    'parallel' batch axis splits evenly across v7x's two TensorCores, and padding
    waste bounded to <= ~16 rows per tile (instead of blindly rounding up to block_b)."""
    block_b = max(16, (block_b // 16) * 16)
    single = _round_up(B, 16)
    if single <= 64:
        return single                       # tiny batch: one tile, splitting buys nothing
    n = max(2, pl.cdiv(B, block_b))         # enough tiles to respect block_b, at least 2
    if n % 2:
        n += 1                              # even tile count -> balanced 2-TC megacore split
    return _round_up(pl.cdiv(B, n), 16)


@functools.partial(jax.jit, static_argnames=("action_dim", "block_b"))
def actor_critic_forward(state, fused, *, action_dim, block_b=1024):
    """Fused forward. Returns (probs (B,A), log_probs (B,A), value (B,1), entropy (B,))."""
    B, S = state.shape
    A = action_dim
    assert 2 * A + 2 <= FUSED, "action_dim too large for the packed output slab"

    tb = _choose_tile(B, block_b)
    pb = _round_up(B, tb)
    x = state.astype(jnp.bfloat16)                 # half the state read stream
    if pb != B:
        x = jnp.pad(x, ((0, pb - B), (0, 0)))      # zero rows -> finite logits, sliced off below

    flops = 2 * pb * (S * FUSED + FUSED * FUSED + FUSED * FUSED)
    transcendentals = pb * (3 * FUSED + 2)
    bytes_accessed = (2 * (S * FUSED + 2 * FUSED * FUSED)   # bf16 weights
                      + 4 * 3 * FUSED                       # f32 bias slab
                      + 2 * pb * S                          # bf16 state stream
                      + 2 * pb * FUSED)                     # bf16 output slab

    slab = pl.pallas_call(
        functools.partial(_fused_actor_critic_kernel, action_dim=A),
        out_shape=jax.ShapeDtypeStruct((pb, FUSED), jnp.bfloat16),
        grid_spec=pltpu.PrefetchScalarGridSpec(
            num_scalar_prefetch=0,
            grid=(pb // tb,),
            in_specs=[
                pl.BlockSpec((tb, S), lambda i: (i, 0)),         # state tile (pipelined)
                pl.BlockSpec((S, FUSED), lambda i: (0, 0)),      # weights: constant block index
                pl.BlockSpec((FUSED, FUSED), lambda i: (0, 0)),  #   -> stay resident in VMEM
                pl.BlockSpec((FUSED, FUSED), lambda i: (0, 0)),
                pl.BlockSpec((3, FUSED), lambda i: (0, 0)),      # packed f32 biases (tiny)
            ],
            out_specs=pl.BlockSpec((tb, FUSED), lambda i: (i, 0)),
        ),
        compiler_params=pltpu.CompilerParams(dimension_semantics=("parallel",)),
        cost_estimate=pl.CostEstimate(
            flops=flops, transcendentals=transcendentals, bytes_accessed=bytes_accessed),
    )(x, fused["W1"], fused["W2"], fused["W3"], fused["bias"])

    slab = slab[:B]
    probs = slab[:, :A].astype(jnp.float32)
    log_probs = slab[:, A:2 * A].astype(jnp.float32)
    value = slab[:, 2 * A:2 * A + 1].astype(jnp.float32)
    entropy = slab[:, 2 * A + 1].astype(jnp.float32)
    return probs, log_probs, value, entropy


def init_params(key, state_dim, action_dim, hidden=HIDDEN):
    """Deterministic synthetic parameters. Weights stored as (in, out)."""
    ks = jax.random.split(key, 12)

    def lin(k_w, k_b, fan_in, fan_out):
        # PyTorch nn.Linear default init: U(-1/sqrt(fan_in), 1/sqrt(fan_in))
        bound = 1.0 / jnp.sqrt(jnp.float32(fan_in))
        w = jax.random.uniform(k_w, (fan_in, fan_out), jnp.float32, -bound, bound)
        b = jax.random.uniform(k_b, (1, fan_out), jnp.float32, -bound, bound)
        return w, b

    aw1, ab1 = lin(ks[0], ks[1], state_dim, hidden)
    aw2, ab2 = lin(ks[2], ks[3], hidden, hidden)
    aw3, ab3 = lin(ks[4], ks[5], hidden, action_dim)
    cw1, cb1 = lin(ks[6], ks[7], state_dim, hidden)
    cw2, cb2 = lin(ks[8], ks[9], hidden, hidden)
    cw3, cb3 = lin(ks[10], ks[11], hidden, 1)
    return dict(
        aw1=aw1, ab1=ab1, aw2=aw2, ab2=ab2, aw3=aw3, ab3=ab3,
        cw1=cw1, cb1=cb1, cw2=cw2, cb2=cb2, cw3=cw3, cb3=cb3,
    )


def pack_params(params):
    """Fuse actor+critic weights into 3 lane-dense bf16 matmul operands + one (3,128) f32 bias."""
    A = params["aw3"].shape[1]
    H = HIDDEN
    w1 = jnp.concatenate([params["aw1"], params["cw1"]], axis=1)              # (S, 128)
    b1 = jnp.concatenate([params["ab1"], params["cb1"]], axis=1)              # (1, 128)
    w2 = jnp.zeros((FUSED, FUSED), jnp.float32)
    w2 = w2.at[:H, :H].set(params["aw2"]).at[H:, H:].set(params["cw2"])       # block-diag
    b2 = jnp.concatenate([params["ab2"], params["cb2"]], axis=1)              # (1, 128)
    w3 = jnp.zeros((FUSED, FUSED), jnp.float32)
    w3 = w3.at[:H, :A].set(params["aw3"]).at[H:, A:A + 1].set(params["cw3"])  # logits | value
    b3 = jnp.zeros((1, FUSED), jnp.float32)
    b3 = b3.at[:, :A].set(params["ab3"]).at[:, A:A + 1].set(params["cb3"])
    bias = jnp.concatenate([b1, b2, b3], axis=0)                              # (3, 128) f32
    # bf16 weights halve weight DMA and hit the MXU's native bf16 path on v5e/v6e/v7x;
    # biases stay f32 (tiny, added to the f32 accumulator).
    return dict(W1=w1.astype(jnp.bfloat16), W2=w2.astype(jnp.bfloat16),
                W3=w3.astype(jnp.bfloat16), bias=bias)


def evaluate(state, action, fused, *, action_dim):
    """ActorCriticShielded.evaluate with shield=None: (log_prob, state_values, dist_entropy)."""
    _, log_probs, value, entropy = actor_critic_forward(state, fused, action_dim=action_dim)
    log_prob = jnp.take_along_axis(log_probs, action[:, None], axis=-1)[:, 0]
    return log_prob, value, entropy


def act(state, fused, *, action_dim, deterministic=True, key=None):
    """ActorCriticShielded.act with shield=None (deterministic -> distribution.mode())."""
    _, log_probs, value, _ = actor_critic_forward(state, fused, action_dim=action_dim)
    if deterministic:
        actions = jnp.argmax(log_probs, axis=-1)
    else:
        # TODO(synk): stochastic Categorical sampling uses host-side JAX RNG (categorical);
        # no dedicated in-kernel equivalent is needed.
        actions = jax.random.categorical(key, log_probs, axis=-1)
    log_prob = jnp.take_along_axis(log_probs, actions[:, None], axis=-1)[:, 0]
    return actions, log_prob, value


def _reference(state, params):
    h = jnp.tanh(state @ params["aw1"] + params["ab1"])
    h = jnp.tanh(h @ params["aw2"] + params["ab2"])
    logits = h @ params["aw3"] + params["ab3"]
    probs = jax.nn.softmax(logits, axis=-1)
    logp = jax.nn.log_softmax(logits, axis=-1)
    entropy = -jnp.sum(probs * logp, axis=-1)
    c = jnp.tanh(state @ params["cw1"] + params["cb1"])
    c = jnp.tanh(c @ params["cw2"] + params["cb2"])
    value = c @ params["cw3"] + params["cb3"]
    return probs, logp, value, entropy


if __name__ == "__main__":
    key = jax.random.PRNGKey(0)
    k_state, k_params, k_act = jax.random.split(key, 3)

    batch = 8
    state_dim = 32
    action_dim = 8

    state = jax.random.normal(k_state, (batch, state_dim), jnp.float32)
    raw = init_params(k_params, state_dim, action_dim)
    fused = pack_params(raw)
    action = jax.random.randint(k_act, (batch,), 0, action_dim)

    probs, log_probs, value, entropy = actor_critic_forward(state, fused, action_dim=action_dim)
    jax.block_until_ready((probs, log_probs, value, entropy))

    # correctness check against pure-JAX f32 reference (unfused params); tolerances account
    # for the bf16 weight/activation/output datapath and the approx reciprocal.
    ref_probs, ref_logp, ref_value, ref_entropy = _reference(state, raw)
    assert jnp.allclose(probs, ref_probs, atol=2e-2, rtol=2e-2)
    assert jnp.allclose(log_probs, ref_logp, atol=8e-2, rtol=2e-2)
    assert jnp.allclose(value, ref_value, atol=5e-2, rtol=2e-2)
    assert jnp.allclose(entropy, ref_entropy, atol=1.5e-1, rtol=2e-2)
    assert jnp.allclose(jnp.sum(probs, axis=-1), 1.0, atol=2e-2)
    assert bool(jnp.all(probs >= 0.0))

    log_prob, state_values, dist_entropy = evaluate(state, action, fused, action_dim=action_dim)
    actions, act_log_prob, act_value = act(state, fused, action_dim=action_dim, deterministic=True)
    jax.block_until_ready((log_prob, state_values, dist_entropy,
                           actions, act_log_prob, act_value))

    # exercise the multi-tile batch-grid path:
    #   B=600 -> tile 304, padded to 608, grid=(2,) -> even split across v7x's 2 TCs
    big_state = jax.random.normal(k_state, (600, state_dim), jnp.float32)
    bp, blp, bv, be = actor_critic_forward(big_state, fused, action_dim=action_dim)
    jax.block_until_ready((bp, blp, bv, be))
    rbp, rblp, rbv, rbe = _reference(big_state, raw)
    assert jnp.allclose(bp, rbp, atol=2e-2, rtol=2e-2)
    assert jnp.allclose(blp, rblp, atol=8e-2, rtol=2e-2)
    assert jnp.allclose(bv, rbv, atol=5e-2, rtol=2e-2)

    # exercise a big even multi-tile grid with the raised default block_b (B=4096 -> grid=(4,))
    huge_state = jax.random.normal(k_state, (4096, state_dim), jnp.float32)
    hp, hlp, hv, he = actor_critic_forward(huge_state, fused, action_dim=action_dim)
    jax.block_until_ready((hp, hlp, hv, he))
    assert jnp.allclose(jnp.sum(hp, axis=-1), 1.0, atol=2e-2)

    print("KERNEL_OK")
</pallas_src>

<mosaic_0001>
module attributes {stable_mosaic.version = 11 : i64} {
  func.func @_fused_actor_critic_kernel(%arg0: i32, %arg1: memref<16x32xbf16, #tpu.memory_space<vmem>>, %arg2: memref<32x128xbf16, #tpu.memory_space<vmem>>, %arg3: memref<128x128xbf16, #tpu.memory_space<vmem>>, %arg4: memref<128x128xbf16, #tpu.memory_space<vmem>>, %arg5: memref<3x128xf32, #tpu.memory_space<vmem>>, %arg6: memref<16x128xbf16, #tpu.memory_space<vmem>>) attributes {dimension_semantics = [#tpu.dimension_semantics<parallel>], iteration_bounds = array<i64: 1>, scalar_prefetch = 0 : i64, scratch_operands = 0 : i64, tpu.core_type = #tpu.core_type<tc>, window_params = [{transform_indices = @transform_0, window_bounds = array<i64: 16, 32>}, {pipeline_mode = #tpu.pipeline_mode<synchronous>, transform_indices = @transform_1, window_bounds = array<i64: 32, 128>}, {pipeline_mode = #tpu.pipeline_mode<synchronous>, transform_indices = @transform_2, window_bounds = array<i64: 128, 128>}, {pipeline_mode = #tpu.pipeline_mode<synchronous>, transform_indices = @transform_3, window_bounds = array<i64: 128, 128>}, {pipeline_mode = #tpu.pipeline_mode<synchronous>, transform_indices = @transform_4, window_bounds = array<i64: 3, 128>}, {transform_indices = @transform_5, window_bounds = array<i64: 16, 128>}]} {
    %c0 = arith.constant 0 : index
    %c0_0 = arith.constant 0 : index
    %0 = vector.load %arg1[%c0, %c0_0] : memref<16x32xbf16, #tpu.memory_space<vmem>>, vector<16x32xbf16>
    %c0_1 = arith.constant 0 : index
    %c0_2 = arith.constant 0 : index
    %1 = vector.load %arg2[%c0_1, %c0_2] : memref<32x128xbf16, #tpu.memory_space<vmem>>, vector<32x128xbf16>
    %cst = arith.constant dense<0.000000e+00> : vector<16x128xf32>
    %2 = tpu.matmul %0, %1, %cst {dimension_numbers = #tpu.dot_dimension_numbers<[1], [0], [0], [1], [0, 0, 1, 1], [], []>} : vector<16x32xbf16>, vector<32x128xbf16>, vector<16x128xf32> -> vector<16x128xf32>
    %c0_3 = arith.constant 0 : index
    %c0_4 = arith.constant 0 : index
    %3 = vector.load %arg5[%c0_3, %c0_4] : memref<3x128xf32, #tpu.memory_space<vmem>>, vector<1x128xf32>
    %4 = vector.broadcast %3 : vector<1x128xf32> to vector<16x128xf32>
    %5 = arith.addf %2, %4 : vector<16x128xf32>
    %6 = arith.truncf %5 : vector<16x128xf32> to vector<16x128xbf16>
    %7 = math.tanh %6 : vector<16x128xbf16>
    %c0_5 = arith.constant 0 : index
    %c0_6 = arith.constant 0 : index
    %8 = vector.load %arg3[%c0_5, %c0_6] : memref<128x128xbf16, #tpu.memory_space<vmem>>, vector<128x128xbf16>
    %cst_7 = arith.constant dense<0.000000e+00> : vector<16x128xf32>
    %9 = tpu.matmul %7, %8, %cst_7 {dimension_numbers = #tpu.dot_dimension_numbers<[1], [0], [0], [1], [0, 0, 1, 1], [], []>} : vector<16x128xbf16>, vector<128x128xbf16>, vector<16x128xf32> -> vector<16x128xf32>
    %c1 = arith.constant 1 : index
    %c0_8 = arith.constant 0 : index
    %10 = vector.load %arg5[%c1, %c0_8] : memref<3x128xf32, #tpu.memory_space<vmem>>, vector<1x128xf32>
    %11 = vector.broadcast %10 : vector<1x128xf32> to vector<16x128xf32>
    %12 = arith.addf %9, %11 : vector<16x128xf32>
    %13 = arith.truncf %12 : vector<16x128xf32> to vector<16x128xbf16>
    %14 = math.tanh %13 : vector<16x128xbf16>
    %c0_9 = arith.constant 0 : index
    %c0_10 = arith.constant 0 : index
    %15 = vector.load %arg4[%c0_9, %c0_10] : memref<128x128xbf16, #tpu.memory_space<vmem>>, vector<128x128xbf16>
    %cst_11 = arith.constant dense<0.000000e+00> : vector<16x128xf32>
    %16 = tpu.matmul %14, %15, %cst_11 {dimension_numbers = #tpu.dot_dimension_numbers<[1], [0], [0], [1], [0, 0, 1, 1], [], []>} : vector<16x128xbf16>, vector<128x128xbf16>, vector<16x128xf32> -> vector<16x128xf32>
    %c2 = arith.constant 2 : index
    %c0_12 = arith.constant 0 : index
    %17 = vector.load %arg5[%c2, %c0_12] : memref<3x128xf32, #tpu.memory_space<vmem>>, vector<1x128xf32>
    %18 = vector.broadcast %17 : vector<1x128xf32> to vector<16x128xf32>
    %19 = arith.addf %16, %18 : vector<16x128xf32>
    %20 = tpu.iota {dimensions = array<i32: 1>} : vector<16x128xi32>
    %c8_i32 = arith.constant 8 : i32
    %21 = vector.broadcast %c8_i32 : i32 to vector<16x128xi32>
    %22 = arith.cmpi slt, %20, %21 : vector<16x128xi32>
    %cst_13 = arith.constant 0xFF800000 : f32
    %23 = vector.broadcast %cst_13 : f32 to vector<16x128xf32>
    %24 = arith.select %22, %19, %23 : vector<16x128xi1>, vector<16x128xf32>
    %cst_14 = arith.constant dense<0xFF800000> : vector<16xf32>
    %25 = vector.multi_reduction <maximumf>, %24, %cst_14 [1] : vector<16x128xf32> to vector<16xf32>
    %26 = vector.shape_cast %25 : vector<16xf32> to vector<16x1xf32>
    %27 = vector.broadcast %26 : vector<16x1xf32> to vector<16x128xf32>
    %28 = arith.subf %24, %27 : vector<16x128xf32>
    %29 = arith.truncf %28 : vector<16x128xf32> to vector<16x128xbf16>
    %30 = math.exp %29 : vector<16x128xbf16>
    %31 = arith.extf %30 : vector<16x128xbf16> to vector<16x128xf32>
    %cst_15 = arith.constant dense<0.000000e+00> : vector<16xf32>
    %32 = vector.multi_reduction <add>, %31, %cst_15 [1] : vector<16x128xf32> to vector<16xf32>
    %33 = vector.shape_cast %32 : vector<16xf32> to vector<16x1xf32>
    %34 = tpu.reciprocal %33 {approx = true} : vector<16x1xf32> -> vector<16x1xf32>
    %35 = vector.broadcast %34 : vector<16x1xf32> to vector<16x128xf32>
    %36 = arith.mulf %31, %35 : vector<16x128xf32>
    %37 = math.log %33 : vector<16x1xf32>
    %38 = arith.addf %26, %37 : vector<16x1xf32>
    %39 = vector.broadcast %38 : vector<16x1xf32> to vector<16x128xf32>
    %40 = arith.subf %19, %39 : vector<16x128xf32>
    %cst_16 = arith.constant 0.000000e+00 : f32
    %41 = vector.broadcast %cst_16 : f32 to vector<16x128xf32>
    %42 = arith.select %22, %40, %41 : vector<16x128xi1>, vector<16x128xf32>
    %43 = arith.mulf %36, %42 : vector<16x128xf32>
    %cst_17 = arith.constant dense<0.000000e+00> : vector<16xf32>
    %44 = vector.multi_reduction <add>, %43, %cst_17 [1] : vector<16x128xf32> to vector<16xf32>
    %45 = vector.shape_cast %44 : vector<16xf32> to vector<16x1xf32>
    %cst_18 = arith.constant 0.000000e+00 : f32
    %46 = vector.broadcast %cst_18 : f32 to vector<16x1xf32>
    %47 = arith.subf %46, %45 : vector<16x1xf32>
    %c8_i32_19 = arith.constant 8 : i32
    %48 = vector.broadcast %c8_i32_19 : i32 to vector<16x128xi32>
    %49 = arith.cmpi eq, %20, %48 : vector<16x128xi32>
    %cst_20 = arith.constant 0.000000e+00 : f32
    %50 = vector.broadcast %cst_20 : f32 to vector<16x128xf32>
    %51 = arith.select %49, %19, %50 : vector<16x128xi1>, vector<16x128xf32>
    %cst_21 = arith.constant dense<0.000000e+00> : vector<16xf32>
    %52 = vector.multi_reduction <add>, %51, %cst_21 [1] : vector<16x128xf32> to vector<16xf32>
    %53 = vector.shape_cast %52 : vector<16xf32> to vector<16x1xf32>
    %c8_i32_22 = arith.constant 8 : i32
    %54 = vector.broadcast %c8_i32_22 : i32 to vector<16x128xi32>
    %55 = arith.cmpi sge, %20, %54 : vector<16x128xi32>
    %c16_i32 = arith.constant 16 : i32
    %56 = vector.broadcast %c16_i32 : i32 to vector<16x128xi32>
    %57 = arith.cmpi slt, %20, %56 : vector<16x128xi32>
    %58 = arith.andi %55, %57 : vector<16x128xi1>
    %c8_i32_23 = arith.constant 8 : i32
    %59 = tpu.dynamic_rotate %42 by %c8_i32_23 dim 1 : vector<16x128xf32>, i32 -> vector<16x128xf32>
    %cst_24 = arith.constant 0.000000e+00 : f32
    %60 = vector.broadcast %cst_24 : f32 to vector<16x128xf32>
    %61 = arith.select %58, %59, %60 : vector<16x128xi1>, vector<16x128xf32>
    %62 = arith.addf %36, %61 : vector<16x128xf32>
    %c16_i32_25 = arith.constant 16 : i32
    %63 = vector.broadcast %c16_i32_25 : i32 to vector<16x128xi32>
    %64 = arith.cmpi eq, %20, %63 : vector<16x128xi32>
    %cst_26 = arith.constant 0.000000e+00 : f32
    %65 = vector.shape_cast %53 : vector<16x1xf32> to vector<16x1xf32>
    %66 = vector.broadcast %65 : vector<16x1xf32> to vector<16x128xf32>
    %67 = vector.broadcast %cst_26 : f32 to vector<16x128xf32>
    %68 = arith.select %64, %66, %67 : vector<16x128xi1>, vector<16x128xf32>
    %69 = arith.addf %62, %68 : vector<16x128xf32>
    %c17_i32 = arith.constant 17 : i32
    %70 = vector.broadcast %c17_i32 : i32 to vector<16x128xi32>
    %71 = arith.cmpi eq, %20, %70 : vector<16x128xi32>
    %cst_27 = arith.constant 0.000000e+00 : f32
    %72 = vector.shape_cast %47 : vector<16x1xf32> to vector<16x1xf32>
    %73 = vector.broadcast %72 : vector<16x1xf32> to vector<16x128xf32>
    %74 = vector.broadcast %cst_27 : f32 to vector<16x128xf32>
    %75 = arith.select %71, %73, %74 : vector<16x128xi1>, vector<16x128xf32>
    %76 = arith.addf %69, %75 : vector<16x128xf32>
    %77 = arith.truncf %76 : vector<16x128xf32> to vector<16x128xbf16>
    %c0_28 = arith.constant 0 : index
    %c0_29 = arith.constant 0 : index
    %78 = vector.load %arg6[%c0_28, %c0_29] : memref<16x128xbf16, #tpu.memory_space<vmem>>, vector<16x128xbf16>
    tpu.vector_store %arg6[%c0_28, %c0_29], %77 {strides = array<i32>} : memref<16x128xbf16, #tpu.memory_space<vmem>>, vector<16x128xbf16>,
    return
  }
  func.func @transform_0(%arg0: i32) -> (i32, i32) {
    %c0_i32 = arith.constant 0 : i32
    %c0_i32_0 = arith.constant 0 : i32
    return %arg0, %c0_i32 : i32, i32
  }
  func.func @transform_1(%arg0: i32) -> (i32, i32) {
    %c0_i32 = arith.constant 0 : i32
    %c0_i32_0 = arith.constant 0 : i32
    %c0_i32_1 = arith.constant 0 : i32
    return %c0_i32, %c0_i32_0 : i32, i32
  }
  func.func @transform_2(%arg0: i32) -> (i32, i32) {
    %c0_i32 = arith.constant 0 : i32
    %c0_i32_0 = arith.constant 0 : i32
    %c0_i32_1 = arith.constant 0 : i32
    return %c0_i32, %c0_i32_0 : i32, i32
  }
  func.func @transform_3(%arg0: i32) -> (i32, i32) {
    %c0_i32 = arith.constant 0 : i32
    %c0_i32_0 = arith.constant 0 : i32
    %c0_i32_1 = arith.constant 0 : i32
    return %c0_i32, %c0_i32_0 : i32, i32
  }
  func.func @transform_4(%arg0: i32) -> (i32, i32) {
    %c0_i32 = arith.constant 0 : i32
    %c0_i32_0 = arith.constant 0 : i32
    %c0_i32_1 = arith.constant 0 : i32
    return %c0_i32, %c0_i32_0 : i32, i32
  }
  func.func @transform_5(%arg0: i32) -> (i32, i32) {
    %c0_i32 = arith.constant 0 : i32
    %c0_i32_0 = arith.constant 0 : i32
    return %arg0, %c0_i32 : i32, i32
  }
}

</mosaic_0001>

<llo_original>
// kernel: actor_critic_forward.1
$region0: #{actor_critic_forward.1}
  #allocation0 [shape = 'u32[]', space=smem, size = 0x4, offset = 0x4, fixed_abs, tag = 'smem constant byte address 0x4 - core index']
  #allocation1 [shape = 'u32[144,128]{1,0:T(1,128)}', space=vmem, size = 0x12000, scoped, tag = 'internal scratch']
  %s0 = inlined_call_operand.vmem [shape: bf16[16,32], index: 0, kind: input, shape index: {}]
  %s1 = inlined_call_operand.vmem [shape: bf16[32,128], index: 1, kind: input, shape index: {}]
  %s2 = inlined_call_operand.hbm [shape: bf16[128,128], index: 2, kind: input, shape index: {}]
  %s3 = inlined_call_operand.hbm [shape: bf16[128,128], index: 3, kind: input, shape index: {}]
  %s4 = inlined_call_operand.vmem [shape: f32[3,128], index: 4, kind: input, shape index: {}]
  %s5 = inlined_call_operand.vmem [shape: bf16[16,128], index: 5, kind: output, shape index: {}]
  %s6 = sld [smem:[#allocation0]]
  $region38: #{actor_critic_forward.1} parent=0
    _
  %s8 = ssub.s32 1, %s6
  %s9 = scalar_select 0, %s8, %s6
  $region1: #{actor_critic_forward.1} parent=0
    #allocation2 [shape = 'u8[32768]{0}', space=vmem, size = 0x8000, scoped, tag = 'input window, operand 2, single buffered']
    #allocation3 [shape = 's32[1]{0}', space=sflag, size = 0x4, scoped, tag = 'scoped memory for actor_critic_forward.1']
    #allocation4 [shape = 'u8[32768]{0}', space=vmem, size = 0x8000, scoped, tag = 'input window, operand 3, single buffered']
    #allocation5 [shape = 's32[1]{0}', space=sflag, size = 0x4, scoped, tag = 'scoped memory for actor_critic_forward.1']
    %10 = vsyncpa [#allocation3], 0
    %11 = vsyncpa [#allocation5], 0
    // Predicated region
    $region2: #{actor_critic_forward.1} parent=1 // pred_check
      _
    $region3: #{actor_critic_forward.1} parent=1 // pred_check_branch
      %13 = sbr.rel (0) target = $region5
    $region4: #{actor_critic_forward.1} parent=1 // pred_region
      _
    $region5: #{actor_critic_forward.1} parent=1 // pred_fallthru
      _
    // Predicated region
    $region6: #{actor_critic_forward.1} parent=1 // pred_check
      _
    $region7: #{actor_critic_forward.1} parent=1 // pred_check_branch
      %15 = sbr.rel (0) target = $region9
    $region8: #{actor_critic_forward.1} parent=1 // pred_region
      _
    $region9: #{actor_critic_forward.1} parent=1 // pred_fallthru
      _
    // Predicated region
    $region10: #{actor_critic_forward.1} parent=1 // pred_check
      _
    $region11: #{actor_critic_forward.1} parent=1 // pred_check_branch
      %17 = sbr.rel (0) target = $region13
    $region12: #{actor_critic_forward.1} parent=1 // pred_region
      %s19 = ssub.s32 1024, 1024
      %20 = vsyncadd [#allocation3], %s19
      %s21 = sshll.u32 [#allocation2], 4
      %s22 = int_to_ptr.vmem [resolvable:$true] %s21
      %27 = dma.hbm_to_vmem [thread:$0]  %s2, 1024, %s22, [#allocation3], 64, 64, 4
    $region13: #{actor_critic_forward.1} parent=1 // pred_fallthru
      _
    // Predicated region
    $region14: #{actor_critic_forward.1} parent=1 // pred_check
      _
    $region15: #{actor_critic_forward.1} parent=1 // pred_check_branch
      %29 = sbr.rel (0) target = $region17
    $region16: #{actor_critic_forward.1} parent=1 // pred_region
      %s31 = ssub.s32 1024, 1024
      %32 = vsyncadd [#allocation5], %s31
      %s33 = sshll.u32 [#allocation4], 4
      %s34 = int_to_ptr.vmem [resolvable:$true] %s33
      %39 = dma.hbm_to_vmem [thread:$0]  %s3, 1024, %s34, [#allocation5], 64, 64, 4
    $region17: #{actor_critic_forward.1} parent=1 // pred_fallthru
      _
    // Predicated region
    $region18: #{actor_critic_forward.1} parent=1 // pred_check
      _
    $region19: #{actor_critic_forward.1} parent=1 // pred_check_branch
      %41 = sbr.rel (0) target = $region21
    $region20: #{actor_critic_forward.1} parent=1 // pred_region
      _
    $region21: #{actor_critic_forward.1} parent=1 // pred_fallthru
      _
    // Predicated region
    $region22: #{actor_critic_forward.1} parent=1 // pred_check
      _
    $region23: #{actor_critic_forward.1} parent=1 // pred_check_branch
      %43 = sbr.rel (0) target = $region25
    $region24: #{actor_critic_forward.1} parent=1 // pred_region
      %44 = dma.done [#allocation3], 1024
    $region25: #{actor_critic_forward.1} parent=1 // pred_fallthru
      _
    // Predicated region
    $region26: #{actor_critic_forward.1} parent=1 // pred_check
      _
    $region27: #{actor_critic_forward.1} parent=1 // pred_check_branch
      %46 = sbr.rel (0) target = $region29
    $region28: #{actor_critic_forward.1} parent=1 // pred_region
      %47 = dma.done [#allocation5], 1024
    $region29: #{actor_critic_forward.1} parent=1 // pred_fallthru
      _
    %v49 = vld [vmem:[%s0] sm:$0xf]
    %v50 = vld [vmem:[%s0 + $0x4] sm:$0xf]
    %v51 = vld [vmem:[%s1] sm:$0xf]
    %v52 = vld [vmem:[%s1 + $0x4] sm:$0xf]
    %v53 = vld [vmem:[%s1 + $0x8] sm:$0xf]
    %v54 = vld [vmem:[%s1 + $0xc] sm:$0xf]
    %v55 = vld [vmem:[%s4] sm:$0x1]
    %v56 = vlaneseq
    %v57 = vshrl.u32 %v56, 7
    %v58 = vsub.s32 0, %v57
    %v59 = vrot.slane %v55, %v58
    %v62 = vunpack.c.l.b16 %v49
    %v63 = vunpack.c.l.b16 %v50
    %v64 = vpack.c.b16 %v63, %v62
    %v69 = vunpack.c.l.b16 %v51
    %v70 = vunpack.c.l.b16 %v52
    %v71 = vunpack.c.l.b16 %v53
    %v72 = vunpack.c.l.b16 %v54
    %v73 = vpack.c.b16 %v70, %v69
    %v74 = vpack.c.b16 %v72, %v71
    %vm77 = vcmask 261120
    %v79 = vsel %vm77, %v64, 0
    %81 = vmatprep.subr.bf16.mxu0 0
    %82 = vmatpush1.bf16.msra.mxu0 %v73
    %83 = vmatprep.subr.bf16.mxu0 0
    %84 = vmatpush1.bf16.msra.mxu0 %v74
    %85 = vmatprep.subr.bf16.mxu0 0
    %86 = vmatpush1.bf16.msra.mxu0 0
    %87 = vmatprep.subr.bf16.mxu0 0
    %88 = vmatpush1.bf16.msra.mxu0 0
    %89 = vmatprep.subr.bf16.mxu0 0
    %90 = vmatpush1.bf16.msra.mxu0 0
    %91 = vmatprep.subr.bf16.mxu0 0
    %92 = vmatpush1.bf16.msra.mxu0 0
    %93 = vmatprep.subr.bf16.mxu0 0
    %94 = vmatpush1.bf16.msra.mxu0 0
    %95 = vmatprep.subr.bf16.mxu0 0
    %96 = vmatpush1.bf16.msra.mxu0 0
    %97 = vmatprep.subr.bf16.mxu0 0
    %98 = vmatpush1.bf16.msra.mxu0 0
    %99 = vmatprep.subr.bf16.mxu0 0
    %100 = vmatpush1.bf16.msra.mxu0 0
    %101 = vmatprep.subr.bf16.mxu0 0
    %102 = vmatpush1.bf16.msra.mxu0 0
    %103 = vmatprep.subr.bf16.mxu0 0
    %104 = vmatpush1.bf16.msra.mxu0 0
    %105 = vmatprep.subr.bf16.mxu0 0
    %106 = vmatpush1.bf16.msra.mxu0 0
    %107 = vmatprep.subr.bf16.mxu0 0
    %108 = vmatpush1.bf16.msra.mxu0 0
    %109 = vmatprep.subr.bf16.mxu0 0
    %110 = vmatpush1.bf16.msra.mxu0 0
    %111 = vmatprep.subr.bf16.mxu0 0
    %112 = vmatpush1.bf16.msra.mxu0 0
    %113 = vmatprep.mubr.bf16.mxu0 0
    %114 = vmatmul.mubr.bf16.gmra.mrb[0].mxu0 %v79
    %v115 = vpop.f32.mrb[0].mxu0
    %v116 = vadd.f32 %v59, %v115
    %v117 = vpop.f32.mrb[0].mxu0
    %v118 = vpop.f32.mrb[0].mxu0
    %v119 = vadd.f32 %v59, %v118
    %v120 = vpop.f32.mrb[0].mxu0
    %121 = vdwg.mxu0
    %v122 = vpack.c.bf16 %v119, %v116
    %v123 = vtanh.bf16.pop %v122
    %v124 = vld [vmem:[#allocation2] sm:$0xf]
    %v125 = vld [vmem:[#allocation2 + $0x4] sm:$0xf]
    %v126 = vld [vmem:[#allocation2 + $0x8] sm:$0xf]
    %v127 = vld [vmem:[#allocation2 + $0xc] sm:$0xf]
    %v128 = vld [vmem:[#allocation2 + $0x10] sm:$0xf]
    %v129 = vld [vmem:[#allocation2 + $0x14] sm:$0xf]
    %v130 = vld [vmem:[#allocation2 + $0x18] sm:$0xf]
    %v131 = vld [vmem:[#allocation2 + $0x1c] sm:$0xf]
    %v132 = vld [vmem:[#allocation2 + $0x20] sm:$0xf]
    %v133 = vld [vmem:[#allocation2 + $0x24] sm:$0xf]
    %v134 = vld [vmem:[#allocation2 + $0x28] sm:$0xf]
    %v135 = vld [vmem:[#allocation2 + $0x2c] sm:$0xf]
    %v136 = vld [vmem:[#allocation2 + $0x30] sm:$0xf]
    %v137 = vld [vmem:[#allocation2 + $0x34] sm:$0xf]
    %v138 = vld [vmem:[#allocation2 + $0x38] sm:$0xf]
    %v139 = vld [vmem:[#allocation2 + $0x3c] sm:$0xf]
    %v140 = vld [vmem:[%s4 + $0x1] sm:$0x1]
    %v141 = vlaneseq
    %v142 = vshrl.u32 %v141, 7
    %v143 = vsub.s32 0, %v142
    %v144 = vrot.slane %v140, %v143
    %v161 = vunpack.c.l.b16 %v124
    %v162 = vunpack.c.l.b16 %v125
    %v163 = vunpack.c.l.b16 %v126
    %v164 = vunpack.c.l.b16 %v127
    %v165 = vunpack.c.l.b16 %v128
    %v166 = vunpack.c.l.b16 %v129
    %v167 = vunpack.c.l.b16 %v130
    %v168 = vunpack.c.l.b16 %v131
    %v169 = vunpack.c.l.b16 %v132
    %v170 = vunpack.c.l.b16 %v133
    %v171 = vunpack.c.l.b16 %v134
    %v172 = vunpack.c.l.b16 %v135
    %v173 = vunpack.c.l.b16 %v136
    %v174 = vunpack.c.l.b16 %v137
    %v175 = vunpack.c.l.b16 %v138
    %v176 = vunpack.c.l.b16 %v139
    %v177 = vpack.c.b16 %v162, %v161
    %v178 = vpack.c.b16 %v164, %v163
    %v179 = vpack.c.b16 %v166, %v165
    %v180 = vpack.c.b16 %v168, %v167
    %v181 = vpack.c.b16 %v170, %v169
    %v182 = vpack.c.b16 %v172, %v171
    %v183 = vpack.c.b16 %v174, %v173
    %v184 = vpack.c.b16 %v176, %v175
    %193 = vmatprep.subr.bf16.mxu0 0
    %194 = vmatpush1.bf16.msra.mxu0 %v177
    %195 = vmatprep.subr.bf16.mxu0 0
    %196 = vmatpush1.bf16.msra.mxu0 %v178
    %197 = vmatprep.subr.bf16.mxu0 0
    %198 = vmatpush1.bf16.msra.mxu0 %v179
    %199 = vmatprep.subr.bf16.mxu0 0
    %200 = vmatpush1.bf16.msra.mxu0 %v180
    %201 = vmatprep.subr.bf16.mxu0 0
    %202 = vmatpush1.bf16.msra.mxu0 %v181
    %203 = vmatprep.subr.bf16.mxu0 0
    %204 = vmatpush1.bf16.msra.mxu0 %v182
    %205 = vmatprep.subr.bf16.mxu0 0
    %206 = vmatpush1.bf16.msra.mxu0 %v183
    %207 = vmatprep.subr.bf16.mxu0 0
    %208 = vmatpush1.bf16.msra.mxu0 %v184
    %209 = vmatprep.subr.bf16.mxu0 0
    %210 = vmatpush1.bf16.msra.mxu0 0
    %211 = vmatprep.subr.bf16.mxu0 0
    %212 = vmatpush1.bf16.msra.mxu0 0
    %213 = vmatprep.subr.bf16.mxu0 0
    %214 = vmatpush1.bf16.msra.mxu0 0
    %215 = vmatprep.subr.bf16.mxu0 0
    %216 = vmatpush1.bf16.msra.mxu0 0
    %217 = vmatprep.subr.bf16.mxu0 0
    %218 = vmatpush1.bf16.msra.mxu0 0
    %219 = vmatprep.subr.bf16.mxu0 0
    %220 = vmatpush1.bf16.msra.mxu0 0
    %221 = vmatprep.subr.bf16.mxu0 0
    %222 = vmatpush1.bf16.msra.mxu0 0
    %223 = vmatprep.subr.bf16.mxu0 0
    %224 = vmatpush1.bf16.msra.mxu0 0
    %225 = vmatprep.mubr.bf16.mxu0 0
    %226 = vmatmul.mubr.bf16.gmra.mrb[0].mxu0 %v123
    %v227 = vpop.f32.mrb[0].mxu0
    %v228 = vadd.f32 %v144, %v227
    %v229 = vpop.f32.mrb[0].mxu0
    %v230 = vpop.f32.mrb[0].mxu0
    %v231 = vadd.f32 %v144, %v230
    %v232 = vpop.f32.mrb[0].mxu0
    %233 = vdwg.mxu0
    %v234 = vpack.c.bf16 %v231, %v228
    %v235 = vtanh.bf16.pop %v234
    %v236 = vld [vmem:[#allocation4] sm:$0xf]
    %v237 = vld [vmem:[#allocation4 + $0x4] sm:$0xf]
    %v238 = vld [vmem:[#allocation4 + $0x8] sm:$0xf]
    %v239 = vld [vmem:[#allocation4 + $0xc] sm:$0xf]
    %v240 = vld [vmem:[#allocation4 + $0x10] sm:$0xf]
    %v241 = vld [vmem:[#allocation4 + $0x14] sm:$0xf]
    %v242 = vld [vmem:[#allocation4 + $0x18] sm:$0xf]
    %v243 = vld [vmem:[#allocation4 + $0x1c] sm:$0xf]
    %v244 = vld [vmem:[#allocation4 + $0x20] sm:$0xf]
    %v245 = vld [vmem:[#allocation4 + $0x24] sm:$0xf]
    %v246 = vld [vmem:[#allocation4 + $0x28] sm:$0xf]
    %v247 = vld [vmem:[#allocation4 + $0x2c] sm:$0xf]
    %v248 = vld [vmem:[#allocation4 + $0x30] sm:$0xf]
    %v249 = vld [vmem:[#allocation4 + $0x34] sm:$0xf]
    %v250 = vld [vmem:[#allocation4 + $0x38] sm:$0xf]
    %v251 = vld [vmem:[#allocation4 + $0x3c] sm:$0xf]
    %v252 = vld [vmem:[%s4 + $0x2] sm:$0x1]
    %v253 = vlaneseq
    %v254 = vshrl.u32 %v253, 7
    %v255 = vsub.s32 0, %v254
    %v256 = vrot.slane %v252, %v255
    %v273 = vunpack.c.l.b16 %v236
    %v274 = vunpack.c.l.b16 %v237
    %v275 = vunpack.c.l.b16 %v238
    %v276 = vunpack.c.l.b16 %v239
    %v277 = vunpack.c.l.b16 %v240
    %v278 = vunpack.c.l.b16 %v241
    %v279 = vunpack.c.l.b16 %v242
    %v280 = vunpack.c.l.b16 %v243
    %v281 = vunpack.c.l.b16 %v244
    %v282 = vunpack.c.l.b16 %v245
    %v283 = vunpack.c.l.b16 %v246
    %v284 = vunpack.c.l.b16 %v247
    %v285 = vunpack.c.l.b16 %v248
    %v286 = vunpack.c.l.b16 %v249
    %v287 = vunpack.c.l.b16 %v250
    %v288 = vunpack.c.l.b16 %v251
    %v289 = vpack.c.b16 %v274, %v273
    %v290 = vpack.c.b16 %v276, %v275
    %v291 = vpack.c.b16 %v278, %v277
    %v292 = vpack.c.b16 %v280, %v279
    %v293 = vpack.c.b16 %v282, %v281
    %v294 = vpack.c.b16 %v284, %v283
    %v295 = vpack.c.b16 %v286, %v285
    %v296 = vpack.c.b16 %v288, %v287
    %305 = vmatprep.subr.bf16.mxu0 0
    %306 = vmatpush1.bf16.msra.mxu0 %v289
    %307 = vmatprep.subr.bf16.mxu0 0
    %308 = vmatpush1.bf16.msra.mxu0 %v290
    %309 = vmatprep.subr.bf16.mxu0 0
    %310 = vmatpush1.bf16.msra.mxu0 %v291
    %311 = vmatprep.subr.bf16.mxu0 0
    %312 = vmatpush1.bf16.msra.mxu0 %v292
    %313 = vmatprep.subr.bf16.mxu0 0
    %314 = vmatpush1.bf16.msra.mxu0 %v293
    %315 = vmatprep.subr.bf16.mxu0 0
    %316 = vmatpush1.bf16.msra.mxu0 %v294
    %317 = vmatprep.subr.bf16.mxu0 0
    %318 = vmatpush1.bf16.msra.mxu0 %v295
    %319 = vmatprep.subr.bf16.mxu0 0
    %320 = vmatpush1.bf16.msra.mxu0 %v296
    %321 = vmatprep.subr.bf16.mxu0 0
    %322 = vmatpush1.bf16.msra.mxu0 0
    %323 = vmatprep.subr.bf16.mxu0 0
    %324 = vmatpush1.bf16.msra.mxu0 0
    %325 = vmatprep.subr.bf16.mxu0 0
    %326 = vmatpush1.bf16.msra.mxu0 0
    %327 = vmatprep.subr.bf16.mxu0 0
    %328 = vmatpush1.bf16.msra.mxu0 0
    %329 = vmatprep.subr.bf16.mxu0 0
    %330 = vmatpush1.bf16.msra.mxu0 0
    %331 = vmatprep.subr.bf16.mxu0 0
    %332 = vmatpush1.bf16.msra.mxu0 0
    %333 = vmatprep.subr.bf16.mxu0 0
    %334 = vmatpush1.bf16.msra.mxu0 0
    %335 = vmatprep.subr.bf16.mxu0 0
    %336 = vmatpush1.bf16.msra.mxu0 0
    %337 = vmatprep.mubr.bf16.mxu0 0
    %338 = vmatmul.mubr.bf16.gmra.mrb[0].mxu0 %v235
    %v339 = vpop.f32.mrb[0].mxu0
    %v340 = vadd.f32 %v256, %v339
    %v341 = vpop.f32.mrb[0].mxu0
    %v342 = vpop.f32.mrb[0].mxu0
    %v343 = vadd.f32 %v256, %v342
    %v344 = vpop.f32.mrb[0].mxu0
    %345 = vdwg.mxu0
    %v346 = vlaneseq
    %v347 = vand.u32 %v346, 127
    %vm348 = vcmp.lt.s32.totalorder %v347, 8
    %v349 = vsel %vm348, %v340, -inf
    %v350 = vsel %vm348, %v343, -inf
    %351 = vmax.xlane.f32.xlu0 %v349
    %v352 = vpop.xlane.xlu0 %351
    %353 = vmax.xlane.f32.xlu0 %v350
    %v354 = vpop.xlane.xlu0 %353
    %v355 = vsub.f32 %v349, %v352
    %v356 = vsub.f32 %v350, %v354
    %v357 = vpack.c.bf16 %v356, %v355
    %v359 = vmul.bf16 %v357, 1069105081
    %v360 = vpow.bf16.pop %v359
    %v361 = vunpack.c.l.bf16 %v360
    %v362 = vunpack.c.h.bf16 %v360
    %363 = vadd.xlane.f32.xlu0 %v361
    %v364 = vpop.xlane.xlu0 %363
    %365 = vadd.xlane.f32.xlu0 %v362
    %v366 = vpop.xlane.xlu0 %365
    %v367 = vrcp.pop %v364
    %v368 = vrcp.pop %v366
    %v369 = vmul.f32 %v361, %v367
    %v370 = vmul.f32 %v362, %v368
    %v371 = vlog2.pop %v364
    %v372 = vmul.f32 %v371, 0.6931472
    %v373 = vlog2.pop %v366
    %v374 = vmul.f32 %v373, 0.6931472
    %v375 = vadd.f32 %v352, %v372
    %v376 = vadd.f32 %v354, %v374
    %v377 = vsub.f32 %v340, %v375
    %v378 = vsub.f32 %v343, %v376
    %v379 = vsel %vm348, %v377, 0.0
    %v380 = vsel %vm348, %v378, 0.0
    %v381 = vmul.f32 %v369, %v379
    %v382 = vmul.f32 %v370, %v380
    %383 = vadd.xlane.f32.xlu0 %v381
    %v384 = vpop.xlane.xlu0 %383
    %385 = vadd.xlane.f32.xlu0 %v382
    %v386 = vpop.xlane.xlu0 %385
    %v387 = vsub.f32 0.0, %v384
    %v388 = vsub.f32 0.0, %v386
    %vm389 = vcmp.eq.s32.totalorder %v347, 8
    %v390 = vsel %vm389, %v340, 0.0
    %v391 = vsel %vm389, %v343, 0.0
    %392 = vadd.xlane.f32.xlu0 %v390
    %v393 = vpop.xlane.xlu0 %392
    %394 = vadd.xlane.f32.xlu0 %v391
    %v395 = vpop.xlane.xlu0 %394
    %vm396 = vcmp.ge.s32.totalorder %v347, 8
    %vm397 = vcmp.lt.s32.totalorder %v347, 16
    %vm398 = vmand %vm396, %vm397
    %399 = vrot.lane.b32.xlu0 %v379, 8
    %v400 = vpop.permute.xlu0 %399
    %401 = vrot.lane.b32.xlu0 %v380, 8
    %v402 = vpop.permute.xlu0 %401
    %v403 = vsel %vm398, %v400, 0.0
    %v404 = vsel %vm398, %v402, 0.0
    %v405 = vadd.f32 %v369, %v403
    %v406 = vadd.f32 %v370, %v404
    %vm407 = vcmp.eq.s32.totalorder %v347, 16
    %v408 = vsel %vm407, %v393, 0.0
    %v409 = vsel %vm407, %v395, 0.0
    %v410 = vadd.f32 %v405, %v408
    %v411 = vadd.f32 %v406, %v409
    %vm412 = vcmp.eq.s32.totalorder %v347, 17
    %v413 = vsel %vm412, %v387, 0.0
    %v414 = vsel %vm412, %v388, 0.0
    %v415 = vadd.f32 %v410, %v413
    %v416 = vadd.f32 %v411, %v414
    %v417 = vpack.c.bf16 %v416, %v415
    %v419 = vunpack.c.l.b16 %v417
    %v420 = vunpack.c.h.b16 %v417
    %v421 = vpack.c.b16 %v419, %v419
    %v422 = vpack.c.b16 %v420, %v420
    %425 = vst [vmem:[%s5] sm:$0xf] %v421
    %426 = vst [vmem:[%s5 + $0x4] sm:$0xf] %v422
    // Predicated region
    $region30: #{actor_critic_forward.1} parent=1 // pred_check
      _
    $region31: #{actor_critic_forward.1} parent=1 // pred_check_branch
      %428 = sbr.rel (0) target = $region33
    $region32: #{actor_critic_forward.1} parent=1 // pred_region
      _
    $region33: #{actor_critic_forward.1} parent=1 // pred_fallthru
      _
    // Predicated region
    $region34: #{actor_critic_forward.1} parent=1 // pred_check
      _
    $region35: #{actor_critic_forward.1} parent=1 // pred_check_branch
      %430 = sbr.rel (0) target = $region37
    $region36: #{actor_critic_forward.1} parent=1 // pred_region
      _
    $region37: #{actor_critic_forward.1} parent=1 // pred_fallthru
      _
    %431 = vsyncpa [#allocation3], 1
    %432 = vsyncpa [#allocation5], 1

</llo_original>
